<compile_context>
chip_gen: v6e
topology: v6e:2x2x1
jax: 0.10.0
libtpu: 0.0.40
codegen_flags: <defaults>
</compile_context>

<pallas_src>
import functools

import jax
import jax.numpy as jnp
import numpy as np
from jax import lax
from jax.experimental import pallas as pl
from jax.experimental.pallas import tpu as pltpu


def conv_bn_relu_kernel(lhs_ref, w_ref, gb_ref, o_ref, *, eps):
    """One grid step handles a block of Cb output channels.

    lhs_ref : (M, Kp)   im2col'd activations, K zero-padded to Kp (lane-dense)
    w_ref   : (Kp, Cb)  conv weights reshaped to a dense matmul RHS
    gb_ref  : (2, Cb)   row 0 = BN gamma, row 1 = BN beta
    o_ref   : (M, Cb)   output block (M = N*Ho*Wo)
    """
    # Conv = one dense MXU matmul over the full KH*KW*Cin contraction.
    acc = jnp.dot(lhs_ref[...], w_ref[...],
                  preferred_element_type=jnp.float32)          # (M, Cb) f32

    m = acc.shape[0]
    inv_m = 1.0 / m

    # BatchNorm2d training-mode forward: biased batch statistics per channel,
    # computed in a single sweep (sum + sum of squares).
    s = jnp.sum(acc, axis=0, keepdims=True)                    # (1, Cb)
    ss = jnp.sum(acc * acc, axis=0, keepdims=True)             # (1, Cb)
    mean = s * inv_m
    var = jnp.maximum(ss * inv_m - mean * mean, 0.0)

    gamma = gb_ref[0:1, :]
    beta = gb_ref[1:2, :]
    scale = gamma * lax.rsqrt(var + eps)                       # (1, Cb)
    shift = beta - mean * scale                                # (1, Cb)

    # Second (and last) sweep: normalize + affine + ReLU, lane-dense store.
    o_ref[...] = jnp.maximum(acc * scale + shift, 0.0).astype(o_ref.dtype)


def conv_layer_forward(x_nchw, w_oihw, bias, gamma, beta, *,
                       stride, padding, eps=1e-5, cout_block=128):
    n, cin, h, w = x_nchw.shape
    cout, _, kh, kw = w_oihw.shape
    out_h = (h + 2 * padding - kh) // stride + 1
    out_w = (w + 2 * padding - kw) // stride + 1
    m = n * out_h * out_w
    k = kh * kw * cin
    kp = ((k + 127) // 128) * 128            # pad contraction dim to lane width

    # The Conv2d bias is mathematically cancelled by BN's mean subtraction in
    # training mode, so it never reaches the kernel (exact, not approximate).
    del bias

    # --- wrapper glue: layout + im2col (data rearrangement only) -------------
    x = jnp.transpose(x_nchw, (0, 2, 3, 1)).astype(jnp.float32)      # NHWC
    x = jnp.pad(x, ((0, 0), (padding, padding), (padding, padding), (0, 0)))

    taps = []
    for i in range(kh):
        for j in range(kw):
            taps.append(x[:, i:i + (out_h - 1) * stride + 1:stride,
                             j:j + (out_w - 1) * stride + 1:stride, :])
    lhs = jnp.concatenate(taps, axis=-1).reshape(m, k)                # (M, K)
    lhs = jnp.pad(lhs, ((0, 0), (0, kp - k)))                         # (M, Kp)

    # OIHW -> HWIO -> (K, Cout), tap-major with Cin innermost (matches im2col),
    # then zero-pad the contraction dim.
    w_mat = jnp.transpose(w_oihw, (2, 3, 1, 0)).reshape(k, cout).astype(jnp.float32)
    w_mat = jnp.pad(w_mat, ((0, kp - k), (0, 0)))                     # (Kp, Cout)

    gb = jnp.stack([gamma.astype(jnp.float32),
                    beta.astype(jnp.float32)], axis=0)                # (2, Cout)

    cb = min(cout_block, cout)
    assert cout % cb == 0 and cb % 128 == 0, \
        "out_channels must tile into lane-dense blocks (multiples of 128)"
    grid = (cout // cb,)

    kernel = functools.partial(conv_bn_relu_kernel, eps=eps)

    out_2d = pl.pallas_call(
        kernel,
        out_shape=jax.ShapeDtypeStruct((m, cout), jnp.float32),
        grid_spec=pltpu.PrefetchScalarGridSpec(
            num_scalar_prefetch=0,
            grid=grid,
            in_specs=[
                pl.BlockSpec((m, kp), lambda c: (0, 0)),      # im2col LHS (resident)
                pl.BlockSpec((kp, cb), lambda c: (0, c)),     # weight slab
                pl.BlockSpec((2, cb), lambda c: (0, c)),      # gamma/beta
            ],
            out_specs=pl.BlockSpec((m, cb), lambda c: (0, c)),
        ),
        compiler_params=pltpu.CompilerParams(
            dimension_semantics=("parallel",)),
    )(lhs, w_mat, gb)

    # Back to PyTorch's NCHW convention.
    out = out_2d.reshape(n, out_h, out_w, cout)
    return jnp.transpose(out, (0, 3, 1, 2))


def conv_layer_reference(x_nchw, w_oihw, bias, gamma, beta, *,
                         stride, padding, eps=1e-5):
    """Pure-JAX reference with identical semantics (for verification)."""
    x = jnp.transpose(x_nchw, (0, 2, 3, 1)).astype(jnp.float32)
    w_hwio = jnp.transpose(w_oihw, (2, 3, 1, 0)).astype(jnp.float32)
    y = lax.conv_general_dilated(
        x, w_hwio, window_strides=(stride, stride),
        padding=[(padding, padding), (padding, padding)],
        dimension_numbers=("NHWC", "HWIO", "NHWC"))
    y = y + bias.reshape(1, 1, 1, -1)
    mean = jnp.mean(y, axis=(0, 1, 2), keepdims=True)
    var = jnp.mean((y - mean) ** 2, axis=(0, 1, 2), keepdims=True)
    y = (y - mean) * lax.rsqrt(var + eps)
    y = y * gamma.reshape(1, 1, 1, -1) + beta.reshape(1, 1, 1, -1)
    y = jnp.maximum(y, 0.0)
    return jnp.transpose(y, (0, 3, 1, 2))


if __name__ == "__main__":
    # ConvLayer(in_channels=4, out_channels=256, kernel_size=3, stride=1, padding=1)
    N, CIN, H, W = 2, 4, 16, 16
    COUT, K, STRIDE, PAD = 256, 3, 1, 1

    key = jax.random.PRNGKey(0)
    kx, kw, kb, kg, kbe = jax.random.split(key, 5)

    x = jax.random.normal(kx, (N, CIN, H, W), jnp.float32)
    # Deterministic synthetic parameters (PyTorch shapes: OIHW weight, per-channel vectors).
    w = jax.random.normal(kw, (COUT, CIN, K, K), jnp.float32) * 0.1
    b = jax.random.normal(kb, (COUT,), jnp.float32) * 0.05
    gamma = 1.0 + 0.1 * jax.random.normal(kg, (COUT,), jnp.float32)
    beta = 0.1 * jax.random.normal(kbe, (COUT,), jnp.float32)

    out = conv_layer_forward(x, w, b, gamma, beta, stride=STRIDE, padding=PAD)
    out = jax.block_until_ready(out)

    ref = conv_layer_reference(x, w, b, gamma, beta, stride=STRIDE, padding=PAD)
    np.testing.assert_allclose(np.asarray(out), np.asarray(ref),
                               rtol=2e-3, atol=2e-3)

    print("KERNEL_OK")
</pallas_src>

<mosaic_0001>
module attributes {stable_mosaic.version = 11 : i64} {
  func.func @conv_bn_relu_kernel(%arg0: i32, %arg1: memref<512x128xf32, #tpu.memory_space<vmem>>, %arg2: memref<128x128xf32, #tpu.memory_space<vmem>>, %arg3: memref<2x128xf32, #tpu.memory_space<vmem>>, %arg4: memref<512x128xf32, #tpu.memory_space<vmem>>) attributes {dimension_semantics = [#tpu.dimension_semantics<parallel>], iteration_bounds = array<i64: 2>, scalar_prefetch = 0 : i64, scratch_operands = 0 : i64, tpu.core_type = #tpu.core_type<tc>, window_params = [{pipeline_mode = #tpu.pipeline_mode<synchronous>, transform_indices = @transform_0, window_bounds = array<i64: 512, 128>}, {transform_indices = @transform_1, window_bounds = array<i64: 128, 128>}, {transform_indices = @transform_2, window_bounds = array<i64: 2, 128>}, {transform_indices = @transform_3, window_bounds = array<i64: 512, 128>}]} {
    %c0 = arith.constant 0 : index
    %c0_0 = arith.constant 0 : index
    %0 = vector.load %arg1[%c0, %c0_0] : memref<512x128xf32, #tpu.memory_space<vmem>>, vector<512x128xf32>
    %c0_1 = arith.constant 0 : index
    %c0_2 = arith.constant 0 : index
    %1 = vector.load %arg2[%c0_1, %c0_2] : memref<128x128xf32, #tpu.memory_space<vmem>>, vector<128x128xf32>
    %cst = arith.constant dense<0.000000e+00> : vector<512x128xf32>
    %2 = tpu.matmul %0, %1, %cst {dimension_numbers = #tpu.dot_dimension_numbers<[1], [0], [0], [1], [0, 0, 1, 1], [], []>} : vector<512x128xf32>, vector<128x128xf32>, vector<512x128xf32> -> vector<512x128xf32>
    %cst_3 = arith.constant dense<0.000000e+00> : vector<128xf32>
    %3 = vector.multi_reduction <add>, %2, %cst_3 [0] : vector<512x128xf32> to vector<128xf32>
    %4 = vector.shape_cast %3 : vector<128xf32> to vector<1x128xf32>
    %5 = arith.mulf %2, %2 : vector<512x128xf32>
    %cst_4 = arith.constant dense<0.000000e+00> : vector<128xf32>
    %6 = vector.multi_reduction <add>, %5, %cst_4 [0] : vector<512x128xf32> to vector<128xf32>
    %7 = vector.shape_cast %6 : vector<128xf32> to vector<1x128xf32>
    %cst_5 = arith.constant 0.001953125 : f32
    %8 = vector.broadcast %cst_5 : f32 to vector<1x128xf32>
    %9 = arith.mulf %4, %8 : vector<1x128xf32>
    %cst_6 = arith.constant 0.001953125 : f32
    %10 = vector.broadcast %cst_6 : f32 to vector<1x128xf32>
    %11 = arith.mulf %7, %10 : vector<1x128xf32>
    %12 = arith.mulf %9, %9 : vector<1x128xf32>
    %13 = arith.subf %11, %12 : vector<1x128xf32>
    %cst_7 = arith.constant 0.000000e+00 : f32
    %14 = vector.broadcast %cst_7 : f32 to vector<1x128xf32>
    %15 = arith.maximumf %13, %14 : vector<1x128xf32>
    %c0_8 = arith.constant 0 : index
    %c0_9 = arith.constant 0 : index
    %16 = vector.load %arg3[%c0_8, %c0_9] : memref<2x128xf32, #tpu.memory_space<vmem>>, vector<1x128xf32>
    %c1 = arith.constant 1 : index
    %c0_10 = arith.constant 0 : index
    %17 = vector.load %arg3[%c1, %c0_10] : memref<2x128xf32, #tpu.memory_space<vmem>>, vector<1x128xf32>
    %cst_11 = arith.constant 9.99999974E-6 : f32
    %18 = vector.broadcast %cst_11 : f32 to vector<1x128xf32>
    %19 = arith.addf %15, %18 : vector<1x128xf32>
    %20 = math.rsqrt %19 : vector<1x128xf32>
    %21 = arith.mulf %16, %20 : vector<1x128xf32>
    %22 = arith.mulf %9, %21 : vector<1x128xf32>
    %23 = arith.subf %17, %22 : vector<1x128xf32>
    %24 = vector.broadcast %21 : vector<1x128xf32> to vector<512x128xf32>
    %25 = arith.mulf %2, %24 : vector<512x128xf32>
    %26 = vector.broadcast %23 : vector<1x128xf32> to vector<512x128xf32>
    %27 = arith.addf %25, %26 : vector<512x128xf32>
    %cst_12 = arith.constant 0.000000e+00 : f32
    %28 = vector.broadcast %cst_12 : f32 to vector<512x128xf32>
    %29 = arith.maximumf %27, %28 : vector<512x128xf32>
    %c0_13 = arith.constant 0 : index
    %c0_14 = arith.constant 0 : index
    %30 = vector.load %arg4[%c0_13, %c0_14] : memref<512x128xf32, #tpu.memory_space<vmem>>, vector<512x128xf32>
    tpu.vector_store %arg4[%c0_13, %c0_14], %29 {strides = array<i32>} : memref<512x128xf32, #tpu.memory_space<vmem>>, vector<512x128xf32>,
    return
  }
  func.func @transform_0(%arg0: i32) -> (i32, i32) {
    %c0_i32 = arith.constant 0 : i32
    %c0_i32_0 = arith.constant 0 : i32
    %c0_i32_1 = arith.constant 0 : i32
    return %c0_i32, %c0_i32_0 : i32, i32
  }
  func.func @transform_1(%arg0: i32) -> (i32, i32) {
    %c0_i32 = arith.constant 0 : i32
    %c0_i32_0 = arith.constant 0 : i32
    return %c0_i32, %arg0 : i32, i32
  }
  func.func @transform_2(%arg0: i32) -> (i32, i32) {
    %c0_i32 = arith.constant 0 : i32
    %c0_i32_0 = arith.constant 0 : i32
    return %c0_i32, %arg0 : i32, i32
  }
  func.func @transform_3(%arg0: i32) -> (i32, i32) {
    %c0_i32 = arith.constant 0 : i32
    %c0_i32_0 = arith.constant 0 : i32
    return %c0_i32, %arg0 : i32, i32
  }
}

</mosaic_0001>

<llo_original>
// kernel: tpu_custom_call.1
$region0: #{tpu_custom_call.1}
  #allocation0 [shape = 'u32[]', space=smem, size = 0x4, offset = 0x4, fixed_abs, tag = 'smem constant byte address 0x4 - core index']
  #allocation1 [shape = 'u32[144,128]{1,0:T(1,128)}', space=vmem, size = 0x12000, scoped, tag = 'internal scratch']
  %s0 = inlined_call_operand.hbm [shape: f32[512,128], index: 0, kind: input, shape index: {}]
  %s1 = inlined_call_operand.hbm [shape: f32[128,256], index: 1, kind: input, shape index: {}]
  %s2 = inlined_call_operand.hbm [shape: f32[2,256], index: 2, kind: input, shape index: {}]
  %s3 = inlined_call_operand.hbm [shape: f32[512,256], index: 3, kind: output, shape index: {}]
  %s4 = sld [smem:[#allocation0]]
  $region57: #{tpu_custom_call.1} parent=0
    _
  %s6 = ssub.s32 1, %s4
  %s7 = scalar_select 0, %s6, %s4
  $region1: #{tpu_custom_call.1} parent=0
    #allocation2 [shape = 'u8[262144]{0}', space=vmem, size = 0x40000, scoped, tag = 'input window, operand 0, single buffered']
    #allocation3 [shape = 's32[2]{0}', space=sflag, size = 0x8, scoped, tag = 'scoped memory for tpu_custom_call.1']
    #allocation4 [shape = 's32[2]{0}', space=sflag, size = 0x8, scoped, tag = 'scoped memory for tpu_custom_call.1']
    #allocation5 [shape = 'u8[131072]{0}', space=vmem, size = 0x20000, scoped, tag = 'input window, operand 1']
    #allocation6 [shape = 's32[2]{0}', space=sflag, size = 0x8, scoped, tag = 'scoped memory for tpu_custom_call.1']
    #allocation7 [shape = 'u8[2048]{0}', space=vmem, size = 0x800, scoped, tag = 'input window, operand 2']
    #allocation8 [shape = 'u8[524288]{0}', space=vmem, size = 0x80000, scoped, tag = 'output window, operand 0']
    %8 = vsyncpa [#allocation3], 0
    %9 = vsyncpa [#allocation6], 0
    %s10 = scalar_lea.sflag [#allocation6], 1
    %11 = vsyncpa %s10, 0
    %12 = vsyncpa [#allocation4], 0
    %s13 = scalar_lea.sflag [#allocation4], 1
    %14 = vsyncpa %s13, 0
    loop: start=0, step=1, limit=4
    $region2: #{tpu_custom_call.1} parent=1 // loop_pre_header
      _
    $region3: #{tpu_custom_call.1} parent=1 // loop_header
      %s16 = sphi 0, %s20
      %p17 = scmp.ge.s32.totalorder %s16, 4
      %s24 = sphi 0, %s24
      %s26 = sphi 0, %s24
      %s27 = sphi 0, %s26
      %s41 = sphi 0, %s27
      %s47 = sphi 0, %s49
      %s50 = sphi 0, %s47
      %s51 = sphi 0, %s50
      %s67 = sphi 0, %s51
      %s73 = sphi 0, %s75
      %s76 = sphi 0, %s73
      %s77 = sphi 0, %s76
      %s93 = sphi 0, %s77
      %s99 = sphi 0, %s101
      %s102 = sphi 0, %s99
      %s103 = sphi 0, %s102
      %s119 = sphi 0, %s103
    $region4: #{tpu_custom_call.1} parent=1 // loop_header_branch
      %19 = sbr.rel (%p17) target = $region8
    $region5: #{tpu_custom_call.1} parent=1 // loop_body
      %s21 = ssub.s32 %s16, 1
      %s22 = ssub.s32 %s16, 2
      %s23 = sadd.s32 %s16, 1
      %s25 = sadd.s32 %s24, 1
      %p28 = scmp.eq.s32.totalorder %s16, 1
      %p29 = scmp.ne.s32.totalorder %s24, %s26
      %p30 = scmp.eq.s32.totalorder %s16, 0
      %p31 = por %p29, %p30
      %p32 = scmp.ne.s32.totalorder %s24, %s26
      %p33 = scmp.eq.s32.totalorder %s21, 1
      %p34 = por %p32, %p33
      %p35 = scmp.ne.s32.totalorder %s26, %s27
      %p36 = scmp.eq.s32.totalorder %s21, 0
      %p37 = por %p35, %p36
      %p38 = scmp.ne.s32.totalorder %s26, %s27
      %p39 = scmp.eq.s32.totalorder %s22, 1
      %p40 = por %p38, %p39
      %p42 = scmp.ne.s32.totalorder %s27, %s41
      %p43 = scmp.eq.s32.totalorder %s22, 0
      %p44 = por %p42, %p43
      %s45 = ssub.s32 %s16, %s23
      %p46 = scmp.eq.s32.totalorder %s45, 0
      %s48 = sadd.s32 %s47, 1
      %s49 = scalar_select %p46, %s47, %s48
      %p52 = pneg %p46
      %p53 = scmp.eq.s32.totalorder %s16, 1
      %p54 = por %p52, %p53
      %p55 = scmp.ne.s32.totalorder %s47, %s50
      %p56 = scmp.eq.s32.totalorder %s16, 0
      %p57 = por %p55, %p56
      %p58 = scmp.ne.s32.totalorder %s47, %s50
      %p59 = scmp.eq.s32.totalorder %s21, 1
      %p60 = por %p58, %p59
      %p61 = scmp.ne.s32.totalorder %s50, %s51
      %p62 = scmp.eq.s32.totalorder %s21, 0
      %p63 = por %p61, %p62
      %p64 = scmp.ne.s32.totalorder %s50, %s51
      %p65 = scmp.eq.s32.totalorder %s22, 1
      %p66 = por %p64, %p65
      %p68 = scmp.ne.s32.totalorder %s51, %s67
      %p69 = scmp.eq.s32.totalorder %s22, 0
      %p70 = por %p68, %p69
      %s71 = ssub.s32 %s16, %s23
      %p72 = scmp.eq.s32.totalorder %s71, 0
      %s74 = sadd.s32 %s73, 1
      %s75 = scalar_select %p72, %s73, %s74
      %p78 = pneg %p72
      %p79 = scmp.eq.s32.totalorder %s16, 1
      %p80 = por %p78, %p79
      %p81 = scmp.ne.s32.totalorder %s73, %s76
      %p82 = scmp.eq.s32.totalorder %s16, 0
      %p83 = por %p81, %p82
      %p84 = scmp.ne.s32.totalorder %s73, %s76
      %p85 = scmp.eq.s32.totalorder %s21, 1
      %p86 = por %p84, %p85
      %p87 = scmp.ne.s32.totalorder %s76, %s77
      %p88 = scmp.eq.s32.totalorder %s21, 0
      %p89 = por %p87, %p88
      %p90 = scmp.ne.s32.totalorder %s76, %s77
      %p91 = scmp.eq.s32.totalorder %s22, 1
      %p92 = por %p90, %p91
      %p94 = scmp.ne.s32.totalorder %s77, %s93
      %p95 = scmp.eq.s32.totalorder %s22, 0
      %p96 = por %p94, %p95
      %s97 = ssub.s32 %s16, %s23
      %p98 = scmp.eq.s32.totalorder %s97, 0
      %s100 = sadd.s32 %s99, 1
      %s101 = scalar_select %p98, %s99, %s100
      %p104 = pneg %p98
      %p105 = scmp.eq.s32.totalorder %s16, 1
      %p106 = por %p104, %p105
      %p107 = scmp.ne.s32.totalorder %s99, %s102
      %p108 = scmp.eq.s32.totalorder %s16, 0
      %p109 = por %p107, %p108
      %p110 = scmp.ne.s32.totalorder %s99, %s102
      %p111 = scmp.eq.s32.totalorder %s21, 1
      %p112 = por %p110, %p111
      %p113 = scmp.ne.s32.totalorder %s102, %s103
      %p114 = scmp.eq.s32.totalorder %s21, 0
      %p115 = por %p113, %p114
      %p116 = scmp.ne.s32.totalorder %s102, %s103
      %p117 = scmp.eq.s32.totalorder %s22, 1
      %p118 = por %p116, %p117
      %p120 = scmp.ne.s32.totalorder %s103, %s119
      %p121 = scmp.eq.s32.totalorder %s22, 0
      %p122 = por %p120, %p121
      %p123 = scmp.le.s32.totalorder 1, %s16
      %p124 = scmp.lt.s32.totalorder %s16, 3
      %p125 = pnand %p123, %p124
      %p126 = pneg %p125
      // Predicated region
      $region9: #{tpu_custom_call.1} parent=5 // pred_check
        _
      $region10: #{tpu_custom_call.1} parent=5 // pred_check_branch
        %128 = sbr.rel (%p125) target = $region12
      $region11: #{tpu_custom_call.1} parent=5 // pred_region
        %s129 = ssub.s32 %s16, 1
        // Predicated region
        $region13: #{tpu_custom_call.1} parent=11 // pred_check
          %p130 = pneg %p37
        $region14: #{tpu_custom_call.1} parent=11 // pred_check_branch
          %132 = sbr.rel (%p130) target = $region16
        $region15: #{tpu_custom_call.1} parent=11 // pred_region
          %s134 = ssub.s32 8192, 8192
          %135 = vsyncadd [#allocation3], %s134
          %s136 = sshll.u32 [#allocation2], 4
          %s137 = int_to_ptr.vmem [resolvable:$true] %s136
          %142 = dma.hbm_to_vmem [thread:$0]  %s0, 8192, %s137, [#allocation3], 128, 128, 8
        $region16: #{tpu_custom_call.1} parent=11 // pred_fallthru
          _
      $region12: #{tpu_custom_call.1} parent=5 // pred_fallthru
        _
      %p143 = scmp.lt.s32.totalorder %s16, 2
      // Predicated region
      $region17: #{tpu_custom_call.1} parent=5 // pred_check
        %p144 = pneg %p143
      $region18: #{tpu_custom_call.1} parent=5 // pred_check_branch
        %146 = sbr.rel (%p144) target = $region20
      $region19: #{tpu_custom_call.1} parent=5 // pred_region
        // Predicated region
        $region21: #{tpu_custom_call.1} parent=19 // pred_check
          %p147 = pneg %p57
        $region22: #{tpu_custom_call.1} parent=19 // pred_check_branch
          %149 = sbr.rel (%p147) target = $region24
        $region23: #{tpu_custom_call.1} parent=19 // pred_region
          %s150 = sand.u32 %s16, 1
          %s151 = scalar_lea.sflag [#allocation6], %s150
          %s152 = sand.u32 %s47, 1
          %s153 = smul.addr %s152, 128
          %s154 = scalar_lea.vmem [#allocation5], %s153
          %s156 = ssub.s32 2048, 2048
          %157 = vsyncadd %s151, %s156
          %s158 = smul.addr %s16, 128
          %s159 = scalar_lea.hbm %s1, %s158
          %s160 = sshll.u32 %s154, 4
          %s161 = int_to_ptr.vmem [resolvable:$true] %s160
          %166 = dma.hbm_to_vmem [thread:$0]  %s159, 2048, %s161, %s151, 256, 128, 8
        $region24: #{tpu_custom_call.1} parent=19 // pred_fallthru
          _
        // Predicated region
        $region25: #{tpu_custom_call.1} parent=19 // pred_check
          %p167 = pneg %p83
        $region26: #{tpu_custom_call.1} parent=19 // pred_check_branch
          %169 = sbr.rel (%p167) target = $region28
        $region27: #{tpu_custom_call.1} parent=19 // pred_region
          %s170 = sand.u32 %s16, 1
          %s171 = scalar_lea.sflag [#allocation6], %s170
          %s172 = sand.u32 %s73, 1
          %s173 = smul.addr %s172, 2
          %s174 = scalar_lea.vmem [#allocation7], %s173
          %s176 = ssub.s32 32, 32
          %177 = vsyncadd %s171, %s176
          %s178 = smul.addr %s16, 32
          %s179 = scalar_lea.hbm %s2, %s178
          %s181 = sshll.u32 %s174, 4
          %s182 = int_to_ptr.vmem [resolvable:$true] %s181
          %184 = dma.hbm_to_vmem [thread:$0]  %s179, 32, %s182, %s171
        $region28: #{tpu_custom_call.1} parent=19 // pred_fallthru
          _
      $region20: #{tpu_custom_call.1} parent=5 // pred_fallthru
        _
      %p185 = scmp.le.s32.totalorder 1, %s16
      %p186 = scmp.lt.s32.totalorder %s16, 3
      %p187 = pnand %p185, %p186
      %p188 = pneg %p187
      // Predicated region
      $region29: #{tpu_custom_call.1} parent=5 // pred_check
        _
      $region30: #{tpu_custom_call.1} parent=5 // pred_check_branch
        %190 = sbr.rel (%p187) target = $region32
      $region31: #{tpu_custom_call.1} parent=5 // pred_region
        %s191 = ssub.s32 %s16, 1
        // Predicated region
        $region33: #{tpu_custom_call.1} parent=31 // pred_check
          %p192 = pneg %p37
        $region34: #{tpu_custom_call.1} parent=31 // pred_check_branch
          %194 = sbr.rel (%p192) target = $region36
        $region35: #{tpu_custom_call.1} parent=31 // pred_region
          %195 = dma.done [#allocation3], 8192
        $region36: #{tpu_custom_call.1} parent=31 // pred_fallthru
          _
        %s196 = sand.u32 %s21, 1
        %s197 = scalar_lea.sflag [#allocation6], %s196
        %s198 = sand.u32 %s50, 1
        %s199 = smul.addr %s198, 128
        %s200 = scalar_lea.vmem [#allocation5], %s199
        // Predicated region
        $region37: #{tpu_custom_call.1} parent=31 // pred_check
          %p201 = pneg %p63
        $region38: #{tpu_custom_call.1} parent=31 // pred_check_branch
          %203 = sbr.rel (%p201) target = $region40
        $region39: #{tpu_custom_call.1} parent=31 // pred_region
          %204 = dma.done %s197, 2048
        $region40: #{tpu_custom_call.1} parent=31 // pred_fallthru
          _
        %s205 = sand.u32 %s21, 1
        %s206 = scalar_lea.sflag [#allocation6], %s205
        %s207 = sand.u32 %s76, 1
        %s208 = smul.addr %s207, 2
        %s209 = scalar_lea.vmem [#allocation7], %s208
        // Predicated region
        $region41: #{tpu_custom_call.1} parent=31 // pred_check
          %p210 = pneg %p89
        $region42: #{tpu_custom_call.1} parent=31 // pred_check_branch
          %212 = sbr.rel (%p210) target = $region44
        $region43: #{tpu_custom_call.1} parent=31 // pred_region
          %213 = dma.done %s206, 32
        $region44: #{tpu_custom_call.1} parent=31 // pred_fallthru
          _
        %p214 = pneg %p37
        %p215 = pneg %p34
        %s216 = sand.u32 %s21, 1
        %s217 = scalar_lea.sflag [#allocation6], %s216
        %s218 = sand.u32 %s50, 1
        %s219 = smul.addr %s218, 128
        %s220 = scalar_lea.vmem [#allocation5], %s219
        %p221 = pneg %p63
        %p222 = pneg %p60
        %s223 = sand.u32 %s21, 1
        %s224 = scalar_lea.sflag [#allocation6], %s223
        %s225 = sand.u32 %s76, 1
        %s226 = smul.addr %s225, 2
        %s227 = scalar_lea.vmem [#allocation7], %s226
        %p228 = pneg %p89
        %p229 = pneg %p86
        %p230 = pneg %p115
        %p231 = pneg %p112
        %s232 = sand.u32 %s102, 1
        %s233 = scalar_lea.sflag [#allocation4], %s232
        %s234 = sand.u32 %s102, 1
        %s235 = smul.addr %s234, 512
        %s236 = scalar_lea.vmem [#allocation8], %s235
        %v237 = vld [vmem:[#allocation2] sm:$0xff]
        %v238 = vld [vmem:[#allocation2 + $0x8] sm:$0xff]
        %v239 = vld [vmem:[#allocation2 + $0x10] sm:$0xff]
        %v240 = vld [vmem:[#allocation2 + $0x18] sm:$0xff]
        %v241 = vld [vmem:[#allocation2 + $0x20] sm:$0xff]
        %v242 = vld [vmem:[#allocation2 + $0x28] sm:$0xff]
        %v243 = vld [vmem:[#allocation2 + $0x30] sm:$0xff]
        %v244 = vld [vmem:[#allocation2 + $0x38] sm:$0xff]
        %v245 = vld [vmem:[#allocation2 + $0x40] sm:$0xff]
        %v246 = vld [vmem:[#allocation2 + $0x48] sm:$0xff]
        %v247 = vld [vmem:[#allocation2 + $0x50] sm:$0xff]
        %v248 = vld [vmem:[#allocation2 + $0x58] sm:$0xff]
        %v249 = vld [vmem:[#allocation2 + $0x60] sm:$0xff]
        %v250 = vld [vmem:[#allocation2 + $0x68] sm:$0xff]
        %v251 = vld [vmem:[#allocation2 + $0x70] sm:$0xff]
        %v252 = vld [vmem:[#allocation2 + $0x78] sm:$0xff]
        %v253 = vld [vmem:[#allocation2 + $0x80] sm:$0xff]
        %v254 = vld [vmem:[#allocation2 + $0x88] sm:$0xff]
        %v255 = vld [vmem:[#allocation2 + $0x90] sm:$0xff]
        %v256 = vld [vmem:[#allocation2 + $0x98] sm:$0xff]
        %v257 = vld [vmem:[#allocation2 + $0xa0] sm:$0xff]
        %v258 = vld [vmem:[#allocation2 + $0xa8] sm:$0xff]
        %v259 = vld [vmem:[#allocation2 + $0xb0] sm:$0xff]
        %v260 = vld [vmem:[#allocation2 + $0xb8] sm:$0xff]
        %v261 = vld [vmem:[#allocation2 + $0xc0] sm:$0xff]
        %v262 = vld [vmem:[#allocation2 + $0xc8] sm:$0xff]
        %v263 = vld [vmem:[#allocation2 + $0xd0] sm:$0xff]
        %v264 = vld [vmem:[#allocation2 + $0xd8] sm:$0xff]
        %v265 = vld [vmem:[#allocation2 + $0xe0] sm:$0xff]
        %v266 = vld [vmem:[#allocation2 + $0xe8] sm:$0xff]
        %v267 = vld [vmem:[#allocation2 + $0xf0] sm:$0xff]
        %v268 = vld [vmem:[#allocation2 + $0xf8] sm:$0xff]
        %v269 = vld [vmem:[#allocation2 + $0x100] sm:$0xff]
        %v270 = vld [vmem:[#allocation2 + $0x108] sm:$0xff]
        %v271 = vld [vmem:[#allocation2 + $0x110] sm:$0xff]
        %v272 = vld [vmem:[#allocation2 + $0x118] sm:$0xff]
        %v273 = vld [vmem:[#allocation2 + $0x120] sm:$0xff]
        %v274 = vld [vmem:[#allocation2 + $0x128] sm:$0xff]
        %v275 = vld [vmem:[#allocation2 + $0x130] sm:$0xff]
        %v276 = vld [vmem:[#allocation2 + $0x138] sm:$0xff]
        %v277 = vld [vmem:[#allocation2 + $0x140] sm:$0xff]
        %v278 = vld [vmem:[#allocation2 + $0x148] sm:$0xff]
        %v279 = vld [vmem:[#allocation2 + $0x150] sm:$0xff]
        %v280 = vld [vmem:[#allocation2 + $0x158] sm:$0xff]
        %v281 = vld [vmem:[#allocation2 + $0x160] sm:$0xff]
        %v282 = vld [vmem:[#allocation2 + $0x168] sm:$0xff]
        %v283 = vld [vmem:[#allocation2 + $0x170] sm:$0xff]
        %v284 = vld [vmem:[#allocation2 + $0x178] sm:$0xff]
        %v285 = vld [vmem:[#allocation2 + $0x180] sm:$0xff]
        %v286 = vld [vmem:[#allocation2 + $0x188] sm:$0xff]
        %v287 = vld [vmem:[#allocation2 + $0x190] sm:$0xff]
        %v288 = vld [vmem:[#allocation2 + $0x198] sm:$0xff]
        %v289 = vld [vmem:[#allocation2 + $0x1a0] sm:$0xff]
        %v290 = vld [vmem:[#allocation2 + $0x1a8] sm:$0xff]
        %v291 = vld [vmem:[#allocation2 + $0x1b0] sm:$0xff]
        %v292 = vld [vmem:[#allocation2 + $0x1b8] sm:$0xff]
        %v293 = vld [vmem:[#allocation2 + $0x1c0] sm:$0xff]
        %v294 = vld [vmem:[#allocation2 + $0x1c8] sm:$0xff]
        %v295 = vld [vmem:[#allocation2 + $0x1d0] sm:$0xff]
        %v296 = vld [vmem:[#allocation2 + $0x1d8] sm:$0xff]
        %v297 = vld [vmem:[#allocation2 + $0x1e0] sm:$0xff]
        %v298 = vld [vmem:[#allocation2 + $0x1e8] sm:$0xff]
        %v299 = vld [vmem:[#allocation2 + $0x1f0] sm:$0xff]
        %v300 = vld [vmem:[#allocation2 + $0x1f8] sm:$0xff]
        %v301 = vld [vmem:[%s200] sm:$0xff]
        %v302 = vld [vmem:[%s200 + $0x8] sm:$0xff]
        %v303 = vld [vmem:[%s200 + $0x10] sm:$0xff]
        %v304 = vld [vmem:[%s200 + $0x18] sm:$0xff]
        %v305 = vld [vmem:[%s200 + $0x20] sm:$0xff]
        %v306 = vld [vmem:[%s200 + $0x28] sm:$0xff]
        %v307 = vld [vmem:[%s200 + $0x30] sm:$0xff]
        %v308 = vld [vmem:[%s200 + $0x38] sm:$0xff]
        %v309 = vld [vmem:[%s200 + $0x40] sm:$0xff]
        %v310 = vld [vmem:[%s200 + $0x48] sm:$0xff]
        %v311 = vld [vmem:[%s200 + $0x50] sm:$0xff]
        %v312 = vld [vmem:[%s200 + $0x58] sm:$0xff]
        %v313 = vld [vmem:[%s200 + $0x60] sm:$0xff]
        %v314 = vld [vmem:[%s200 + $0x68] sm:$0xff]
        %v315 = vld [vmem:[%s200 + $0x70] sm:$0xff]
        %v316 = vld [vmem:[%s200 + $0x78] sm:$0xff]
        %317 = vmatprep.subr.mxu0 0.0
        %318 = vmatpush1.msra.mxu0 %v316
        %319 = vmatprep.subr.mxu0 0.0
        %320 = vmatpush1.msra.mxu0 %v315
        %321 = vmatprep.subr.mxu0 0.0
        %322 = vmatpush1.msra.mxu0 %v314
        %323 = vmatprep.subr.mxu0 0.0
        %324 = vmatpush1.msra.mxu0 %v313
        %325 = vmatprep.subr.mxu0 0.0
        %326 = vmatpush1.msra.mxu0 %v312
        %327 = vmatprep.subr.mxu0 0.0
        %328 = vmatpush1.msra.mxu0 %v311
        %329 = vmatprep.subr.mxu0 0.0
        %330 = vmatpush1.msra.mxu0 %v310
        %331 = vmatprep.subr.mxu0 0.0
        %332 = vmatpush1.msra.mxu0 %v309
        %333 = vmatprep.subr.mxu0 0.0
        %334 = vmatpush1.msra.mxu0 %v308
        %335 = vmatprep.subr.mxu0 0.0
        %336 = vmatpush1.msra.mxu0 %v307
        %337 = vmatprep.subr.mxu0 0.0
        %338 = vmatpush1.msra.mxu0 %v306
        %339 = vmatprep.subr.mxu0 0.0
        %340 = vmatpush1.msra.mxu0 %v305
        %341 = vmatprep.subr.mxu0 0.0
        %342 = vmatpush1.msra.mxu0 %v304
        %343 = vmatprep.subr.mxu0 0.0
        %344 = vmatpush1.msra.mxu0 %v303
        %345 = vmatprep.subr.mxu0 0.0
        %346 = vmatpush1.msra.mxu0 %v302
        %347 = vmatprep.subr.mxu0 0.0
        %348 = vmatpush1.msra.mxu0 %v301
        %349 = vmatprep.subr.mxu0 0.0
        %350 = vmatpush2.msra.mxu0 0.0
        %351 = vmatprep.subr.mxu0 0.0
        %352 = vmatpush2.msra.mxu0 0.0
        %353 = vmatprep.subr.mxu0 0.0
        %354 = vmatpush2.msra.mxu0 0.0
        %355 = vmatprep.subr.mxu0 0.0
        %356 = vmatpush2.msra.mxu0 0.0
        %357 = vmatprep.subr.mxu0 0.0
        %358 = vmatpush2.msra.mxu0 0.0
        %359 = vmatprep.subr.mxu0 0.0
        %360 = vmatpush2.msra.mxu0 0.0
        %361 = vmatprep.subr.mxu0 0.0
        %362 = vmatpush2.msra.mxu0 0.0
        %363 = vmatprep.subr.mxu0 0.0
        %364 = vmatpush2.msra.mxu0 0.0
        %365 = vmatprep.subr.mxu0 0.0
        %366 = vmatpush2.msra.mxu0 0.0
        %367 = vmatprep.subr.mxu0 0.0
        %368 = vmatpush2.msra.mxu0 0.0
        %369 = vmatprep.subr.mxu0 0.0
        %370 = vmatpush2.msra.mxu0 0.0
        %371 = vmatprep.subr.mxu0 0.0
        %372 = vmatpush2.msra.mxu0 0.0
        %373 = vmatprep.subr.mxu0 0.0
        %374 = vmatpush2.msra.mxu0 0.0
        %375 = vmatprep.subr.mxu0 0.0
        %376 = vmatpush2.msra.mxu0 0.0
        %377 = vmatprep.subr.mxu0 0.0
        %378 = vmatpush2.msra.mxu0 0.0
        %379 = vmatprep.subr.mxu0 0.0
        %380 = vmatpush2.msra.mxu0 0.0
        %381 = vmatprep.mubr.f32.mxu0 0.0
        %382 = vmatmul.mubr.f32.gmra.mxu0 %v237
        %v383 = vpop.f32.mrf.mxu0
        %v384 = vadd.f32 0.0, %v383
        %v385 = vpop.f32.mrf.mxu0
        %386 = vmatprep.mubr.f32.mxu0 0.0
        %387 = vmatmul.mubr.f32.gmra.mxu0 %v238
        %v388 = vpop.f32.mrf.mxu0
        %v389 = vadd.f32 0.0, %v388
        %v390 = vpop.f32.mrf.mxu0
        %391 = vmatprep.mubr.f32.mxu0 0.0
        %392 = vmatmul.mubr.f32.gmra.mxu0 %v239
        %v393 = vpop.f32.mrf.mxu0
        %v394 = vadd.f32 0.0, %v393
        %v395 = vpop.f32.mrf.mxu0
        %396 = vmatprep.mubr.f32.mxu0 0.0
        %397 = vmatmul.mubr.f32.gmra.mxu0 %v240
        %v398 = vpop.f32.mrf.mxu0
        %v399 = vadd.f32 0.0, %v398
        %v400 = vpop.f32.mrf.mxu0
        %401 = vmatprep.mubr.f32.mxu0 0.0
        %402 = vmatmul.mubr.f32.gmra.mxu0 %v241
        %v403 = vpop.f32.mrf.mxu0
        %v404 = vadd.f32 0.0, %v403
        %v405 = vpop.f32.mrf.mxu0
        %406 = vmatprep.mubr.f32.mxu0 0.0
        %407 = vmatmul.mubr.f32.gmra.mxu0 %v242
        %v408 = vpop.f32.mrf.mxu0
        %v409 = vadd.f32 0.0, %v408
        %v410 = vpop.f32.mrf.mxu0
        %411 = vmatprep.mubr.f32.mxu0 0.0
        %412 = vmatmul.mubr.f32.gmra.mxu0 %v243
        %v413 = vpop.f32.mrf.mxu0
        %v414 = vadd.f32 0.0, %v413
        %v415 = vpop.f32.mrf.mxu0
        %416 = vmatprep.mubr.f32.mxu0 0.0
        %417 = vmatmul.mubr.f32.gmra.mxu0 %v244
        %v418 = vpop.f32.mrf.mxu0
        %v419 = vadd.f32 0.0, %v418
        %v420 = vpop.f32.mrf.mxu0
        %421 = vmatprep.mubr.f32.mxu0 0.0
        %422 = vmatmul.mubr.f32.gmra.mxu0 %v245
        %v423 = vpop.f32.mrf.mxu0
        %v424 = vadd.f32 0.0, %v423
        %v425 = vpop.f32.mrf.mxu0
        %426 = vmatprep.mubr.f32.mxu0 0.0
        %427 = vmatmul.mubr.f32.gmra.mxu0 %v246
        %v428 = vpop.f32.mrf.mxu0
        %v429 = vadd.f32 0.0, %v428
        %v430 = vpop.f32.mrf.mxu0
        %431 = vmatprep.mubr.f32.mxu0 0.0
        %432 = vmatmul.mubr.f32.gmra.mxu0 %v247
        %v433 = vpop.f32.mrf.mxu0
        %v434 = vadd.f32 0.0, %v433
        %v435 = vpop.f32.mrf.mxu0
        %436 = vmatprep.mubr.f32.mxu0 0.0
        %437 = vmatmul.mubr.f32.gmra.mxu0 %v248
        %v438 = vpop.f32.mrf.mxu0
        %v439 = vadd.f32 0.0, %v438
        %v440 = vpop.f32.mrf.mxu0
        %441 = vmatprep.mubr.f32.mxu0 0.0
        %442 = vmatmul.mubr.f32.gmra.mxu0 %v249
        %v443 = vpop.f32.mrf.mxu0
        %v444 = vadd.f32 0.0, %v443
        %v445 = vpop.f32.mrf.mxu0
        %446 = vmatprep.mubr.f32.mxu0 0.0
        %447 = vmatmul.mubr.f32.gmra.mxu0 %v250
        %v448 = vpop.f32.mrf.mxu0
        %v449 = vadd.f32 0.0, %v448
        %v450 = vpop.f32.mrf.mxu0
        %451 = vmatprep.mubr.f32.mxu0 0.0
        %452 = vmatmul.mubr.f32.gmra.mxu0 %v251
        %v453 = vpop.f32.mrf.mxu0
        %v454 = vadd.f32 0.0, %v453
        %v455 = vpop.f32.mrf.mxu0
        %456 = vmatprep.mubr.f32.mxu0 0.0
        %457 = vmatmul.mubr.f32.gmra.mxu0 %v252
        %v458 = vpop.f32.mrf.mxu0
        %v459 = vadd.f32 0.0, %v458
        %v460 = vpop.f32.mrf.mxu0
        %461 = vmatprep.mubr.f32.mxu0 0.0
        %462 = vmatmul.mubr.f32.gmra.mxu0 %v253
        %v463 = vpop.f32.mrf.mxu0
        %v464 = vadd.f32 0.0, %v463
        %v465 = vpop.f32.mrf.mxu0
        %466 = vmatprep.mubr.f32.mxu0 0.0
        %467 = vmatmul.mubr.f32.gmra.mxu0 %v254
        %v468 = vpop.f32.mrf.mxu0
        %v469 = vadd.f32 0.0, %v468
        %v470 = vpop.f32.mrf.mxu0
        %471 = vmatprep.mubr.f32.mxu0 0.0
        %472 = vmatmul.mubr.f32.gmra.mxu0 %v255
        %v473 = vpop.f32.mrf.mxu0
        %v474 = vadd.f32 0.0, %v473
        %v475 = vpop.f32.mrf.mxu0
        %476 = vmatprep.mubr.f32.mxu0 0.0
        %477 = vmatmul.mubr.f32.gmra.mxu0 %v256
        %v478 = vpop.f32.mrf.mxu0
        %v479 = vadd.f32 0.0, %v478
        %v480 = vpop.f32.mrf.mxu0
        %481 = vmatprep.mubr.f32.mxu0 0.0
        %482 = vmatmul.mubr.f32.gmra.mxu0 %v257
        %v483 = vpop.f32.mrf.mxu0
        %v484 = vadd.f32 0.0, %v483
        %v485 = vpop.f32.mrf.mxu0
        %486 = vmatprep.mubr.f32.mxu0 0.0
        %487 = vmatmul.mubr.f32.gmra.mxu0 %v258
        %v488 = vpop.f32.mrf.mxu0
        %v489 = vadd.f32 0.0, %v488
        %v490 = vpop.f32.mrf.mxu0
        %491 = vmatprep.mubr.f32.mxu0 0.0
        %492 = vmatmul.mubr.f32.gmra.mxu0 %v259
        %v493 = vpop.f32.mrf.mxu0
        %v494 = vadd.f32 0.0, %v493
        %v495 = vpop.f32.mrf.mxu0
        %496 = vmatprep.mubr.f32.mxu0 0.0
        %497 = vmatmul.mubr.f32.gmra.mxu0 %v260
        %v498 = vpop.f32.mrf.mxu0
        %v499 = vadd.f32 0.0, %v498
        %v500 = vpop.f32.mrf.mxu0
        %501 = vmatprep.mubr.f32.mxu0 0.0
        %502 = vmatmul.mubr.f32.gmra.mxu0 %v261
        %v503 = vpop.f32.mrf.mxu0
        %v504 = vadd.f32 0.0, %v503
        %v505 = vpop.f32.mrf.mxu0
        %506 = vmatprep.mubr.f32.mxu0 0.0
        %507 = vmatmul.mubr.f32.gmra.mxu0 %v262
        %v508 = vpop.f32.mrf.mxu0
        %v509 = vadd.f32 0.0, %v508
        %v510 = vpop.f32.mrf.mxu0
        %511 = vmatprep.mubr.f32.mxu0 0.0
        %512 = vmatmul.mubr.f32.gmra.mxu0 %v263
        %v513 = vpop.f32.mrf.mxu0
        %v514 = vadd.f32 0.0, %v513
        %v515 = vpop.f32.mrf.mxu0
        %516 = vmatprep.mubr.f32.mxu0 0.0
        %517 = vmatmul.mubr.f32.gmra.mxu0 %v264
        %v518 = vpop.f32.mrf.mxu0
        %v519 = vadd.f32 0.0, %v518
        %v520 = vpop.f32.mrf.mxu0
        %521 = vmatprep.mubr.f32.mxu0 0.0
        %522 = vmatmul.mubr.f32.gmra.mxu0 %v265
        %v523 = vpop.f32.mrf.mxu0
        %v524 = vadd.f32 0.0, %v523
        %v525 = vpop.f32.mrf.mxu0
        %526 = vmatprep.mubr.f32.mxu0 0.0
        %527 = vmatmul.mubr.f32.gmra.mxu0 %v266
        %v528 = vpop.f32.mrf.mxu0
        %v529 = vadd.f32 0.0, %v528
        %v530 = vpop.f32.mrf.mxu0
        %531 = vmatprep.mubr.f32.mxu0 0.0
        %532 = vmatmul.mubr.f32.gmra.mxu0 %v267
        %v533 = vpop.f32.mrf.mxu0
        %v534 = vadd.f32 0.0, %v533
        %v535 = vpop.f32.mrf.mxu0
        %536 = vmatprep.mubr.f32.mxu0 0.0
        %537 = vmatmul.mubr.f32.gmra.mxu0 %v268
        %v538 = vpop.f32.mrf.mxu0
        %v539 = vadd.f32 0.0, %v538
        %v540 = vpop.f32.mrf.mxu0
        %541 = vmatprep.mubr.f32.mxu0 0.0
        %542 = vmatmul.mubr.f32.gmra.mxu0 %v269
        %v543 = vpop.f32.mrf.mxu0
        %v544 = vadd.f32 0.0, %v543
        %v545 = vpop.f32.mrf.mxu0
        %546 = vmatprep.mubr.f32.mxu0 0.0
        %547 = vmatmul.mubr.f32.gmra.mxu0 %v270
        %v548 = vpop.f32.mrf.mxu0
        %v549 = vadd.f32 0.0, %v548
        %v550 = vpop.f32.mrf.mxu0
        %551 = vmatprep.mubr.f32.mxu0 0.0
        %552 = vmatmul.mubr.f32.gmra.mxu0 %v271
        %v553 = vpop.f32.mrf.mxu0
        %v554 = vadd.f32 0.0, %v553
        %v555 = vpop.f32.mrf.mxu0
        %556 = vmatprep.mubr.f32.mxu0 0.0
        %557 = vmatmul.mubr.f32.gmra.mxu0 %v272
        %v558 = vpop.f32.mrf.mxu0
        %v559 = vadd.f32 0.0, %v558
        %v560 = vpop.f32.mrf.mxu0
        %561 = vmatprep.mubr.f32.mxu0 0.0
        %562 = vmatmul.mubr.f32.gmra.mxu0 %v273
        %v563 = vpop.f32.mrf.mxu0
        %v564 = vadd.f32 0.0, %v563
        %v565 = vpop.f32.mrf.mxu0
        %566 = vmatprep.mubr.f32.mxu0 0.0
        %567 = vmatmul.mubr.f32.gmra.mxu0 %v274
        %v568 = vpop.f32.mrf.mxu0
        %v569 = vadd.f32 0.0, %v568
        %v570 = vpop.f32.mrf.mxu0
        %571 = vmatprep.mubr.f32.mxu0 0.0
        %572 = vmatmul.mubr.f32.gmra.mxu0 %v275
        %v573 = vpop.f32.mrf.mxu0
        %v574 = vadd.f32 0.0, %v573
        %v575 = vpop.f32.mrf.mxu0
        %576 = vmatprep.mubr.f32.mxu0 0.0
        %577 = vmatmul.mubr.f32.gmra.mxu0 %v276
        %v578 = vpop.f32.mrf.mxu0
        %v579 = vadd.f32 0.0, %v578
        %v580 = vpop.f32.mrf.mxu0
        %581 = vmatprep.mubr.f32.mxu0 0.0
        %582 = vmatmul.mubr.f32.gmra.mxu0 %v277
        %v583 = vpop.f32.mrf.mxu0
        %v584 = vadd.f32 0.0, %v583
        %v585 = vpop.f32.mrf.mxu0
        %586 = vmatprep.mubr.f32.mxu0 0.0
        %587 = vmatmul.mubr.f32.gmra.mxu0 %v278
        %v588 = vpop.f32.mrf.mxu0
        %v589 = vadd.f32 0.0, %v588
        %v590 = vpop.f32.mrf.mxu0
        %591 = vmatprep.mubr.f32.mxu0 0.0
        %592 = vmatmul.mubr.f32.gmra.mxu0 %v279
        %v593 = vpop.f32.mrf.mxu0
        %v594 = vadd.f32 0.0, %v593
        %v595 = vpop.f32.mrf.mxu0
        %596 = vmatprep.mubr.f32.mxu0 0.0
        %597 = vmatmul.mubr.f32.gmra.mxu0 %v280
        %v598 = vpop.f32.mrf.mxu0
        %v599 = vadd.f32 0.0, %v598
        %v600 = vpop.f32.mrf.mxu0
        %601 = vmatprep.mubr.f32.mxu0 0.0
        %602 = vmatmul.mubr.f32.gmra.mxu0 %v281
        %v603 = vpop.f32.mrf.mxu0
        %v604 = vadd.f32 0.0, %v603
        %v605 = vpop.f32.mrf.mxu0
        %606 = vmatprep.mubr.f32.mxu0 0.0
        %607 = vmatmul.mubr.f32.gmra.mxu0 %v282
        %v608 = vpop.f32.mrf.mxu0
        %v609 = vadd.f32 0.0, %v608
        %v610 = vpop.f32.mrf.mxu0
        %611 = vmatprep.mubr.f32.mxu0 0.0
        %612 = vmatmul.mubr.f32.gmra.mxu0 %v283
        %v613 = vpop.f32.mrf.mxu0
        %v614 = vadd.f32 0.0, %v613
        %v615 = vpop.f32.mrf.mxu0
        %616 = vmatprep.mubr.f32.mxu0 0.0
        %617 = vmatmul.mubr.f32.gmra.mxu0 %v284
        %v618 = vpop.f32.mrf.mxu0
        %v619 = vadd.f32 0.0, %v618
        %v620 = vpop.f32.mrf.mxu0
        %621 = vmatprep.mubr.f32.mxu0 0.0
        %622 = vmatmul.mubr.f32.gmra.mxu0 %v285
        %v623 = vpop.f32.mrf.mxu0
        %v624 = vadd.f32 0.0, %v623
        %v625 = vpop.f32.mrf.mxu0
        %626 = vmatprep.mubr.f32.mxu0 0.0
        %627 = vmatmul.mubr.f32.gmra.mxu0 %v286
        %v628 = vpop.f32.mrf.mxu0
        %v629 = vadd.f32 0.0, %v628
        %v630 = vpop.f32.mrf.mxu0
        %631 = vmatprep.mubr.f32.mxu0 0.0
        %632 = vmatmul.mubr.f32.gmra.mxu0 %v287
        %v633 = vpop.f32.mrf.mxu0
        %v634 = vadd.f32 0.0, %v633
        %v635 = vpop.f32.mrf.mxu0
        %636 = vmatprep.mubr.f32.mxu0 0.0
        %637 = vmatmul.mubr.f32.gmra.mxu0 %v288
        %v638 = vpop.f32.mrf.mxu0
        %v639 = vadd.f32 0.0, %v638
        %v640 = vpop.f32.mrf.mxu0
        %641 = vmatprep.mubr.f32.mxu0 0.0
        %642 = vmatmul.mubr.f32.gmra.mxu0 %v289
        %v643 = vpop.f32.mrf.mxu0
        %v644 = vadd.f32 0.0, %v643
        %v645 = vpop.f32.mrf.mxu0
        %646 = vmatprep.mubr.f32.mxu0 0.0
        %647 = vmatmul.mubr.f32.gmra.mxu0 %v290
        %v648 = vpop.f32.mrf.mxu0
        %v649 = vadd.f32 0.0, %v648
        %v650 = vpop.f32.mrf.mxu0
        %651 = vmatprep.mubr.f32.mxu0 0.0
        %652 = vmatmul.mubr.f32.gmra.mxu0 %v291
        %v653 = vpop.f32.mrf.mxu0
        %v654 = vadd.f32 0.0, %v653
        %v655 = vpop.f32.mrf.mxu0
        %656 = vmatprep.mubr.f32.mxu0 0.0
        %657 = vmatmul.mubr.f32.gmra.mxu0 %v292
        %v658 = vpop.f32.mrf.mxu0
        %v659 = vadd.f32 0.0, %v658
        %v660 = vpop.f32.mrf.mxu0
        %661 = vmatprep.mubr.f32.mxu0 0.0
        %662 = vmatmul.mubr.f32.gmra.mxu0 %v293
        %v663 = vpop.f32.mrf.mxu0
        %v664 = vadd.f32 0.0, %v663
        %v665 = vpop.f32.mrf.mxu0
        %666 = vmatprep.mubr.f32.mxu0 0.0
        %667 = vmatmul.mubr.f32.gmra.mxu0 %v294
        %v668 = vpop.f32.mrf.mxu0
        %v669 = vadd.f32 0.0, %v668
        %v670 = vpop.f32.mrf.mxu0
        %671 = vmatprep.mubr.f32.mxu0 0.0
        %672 = vmatmul.mubr.f32.gmra.mxu0 %v295
        %v673 = vpop.f32.mrf.mxu0
        %v674 = vadd.f32 0.0, %v673
        %v675 = vpop.f32.mrf.mxu0
        %676 = vmatprep.mubr.f32.mxu0 0.0
        %677 = vmatmul.mubr.f32.gmra.mxu0 %v296
        %v678 = vpop.f32.mrf.mxu0
        %v679 = vadd.f32 0.0, %v678
        %v680 = vpop.f32.mrf.mxu0
        %681 = vmatprep.mubr.f32.mxu0 0.0
        %682 = vmatmul.mubr.f32.gmra.mxu0 %v297
        %v683 = vpop.f32.mrf.mxu0
        %v684 = vadd.f32 0.0, %v683
        %v685 = vpop.f32.mrf.mxu0
        %686 = vmatprep.mubr.f32.mxu0 0.0
        %687 = vmatmul.mubr.f32.gmra.mxu0 %v298
        %v688 = vpop.f32.mrf.mxu0
        %v689 = vadd.f32 0.0, %v688
        %v690 = vpop.f32.mrf.mxu0
        %691 = vmatprep.mubr.f32.mxu0 0.0
        %692 = vmatmul.mubr.f32.gmra.mxu0 %v299
        %v693 = vpop.f32.mrf.mxu0
        %v694 = vadd.f32 0.0, %v693
        %v695 = vpop.f32.mrf.mxu0
        %696 = vmatprep.mubr.f32.mxu0 0.0
        %697 = vmatmul.mubr.f32.gmra.mxu0 %v300
        %v698 = vpop.f32.mrf.mxu0
        %v699 = vadd.f32 0.0, %v698
        %v700 = vpop.f32.mrf.mxu0
        %701 = vdwg.mxu0
        %v702 = vadd.f32 %v384, %v389
        %v703 = vadd.f32 %v702, %v394
        %v704 = vadd.f32 %v703, %v399
        %v705 = vadd.f32 %v704, %v404
        %v706 = vadd.f32 %v705, %v409
        %v707 = vadd.f32 %v706, %v414
        %v708 = vadd.f32 %v707, %v419
        %v709 = vadd.f32 %v708, %v424
        %v710 = vadd.f32 %v709, %v429
        %v711 = vadd.f32 %v710, %v434
        %v712 = vadd.f32 %v711, %v439
        %v713 = vadd.f32 %v712, %v444
        %v714 = vadd.f32 %v713, %v449
        %v715 = vadd.f32 %v714, %v454
        %v716 = vadd.f32 %v715, %v459
        %v717 = vadd.f32 %v716, %v464
        %v718 = vadd.f32 %v717, %v469
        %v719 = vadd.f32 %v718, %v474
        %v720 = vadd.f32 %v719, %v479
        %v721 = vadd.f32 %v720, %v484
        %v722 = vadd.f32 %v721, %v489
        %v723 = vadd.f32 %v722, %v494
        %v724 = vadd.f32 %v723, %v499
        %v725 = vadd.f32 %v724, %v504
        %v726 = vadd.f32 %v725, %v509
        %v727 = vadd.f32 %v726, %v514
        %v728 = vadd.f32 %v727, %v519
        %v729 = vadd.f32 %v728, %v524
        %v730 = vadd.f32 %v729, %v529
        %v731 = vadd.f32 %v730, %v534
        %v732 = vadd.f32 %v731, %v539
        %v733 = vadd.f32 %v732, %v544
        %v734 = vadd.f32 %v733, %v549
        %v735 = vadd.f32 %v734, %v554
        %v736 = vadd.f32 %v735, %v559
        %v737 = vadd.f32 %v736, %v564
        %v738 = vadd.f32 %v737, %v569
        %v739 = vadd.f32 %v738, %v574
        %v740 = vadd.f32 %v739, %v579
        %v741 = vadd.f32 %v740, %v584
        %v742 = vadd.f32 %v741, %v589
        %v743 = vadd.f32 %v742, %v594
        %v744 = vadd.f32 %v743, %v599
        %v745 = vadd.f32 %v744, %v604
        %v746 = vadd.f32 %v745, %v609
        %v747 = vadd.f32 %v746, %v614
        %v748 = vadd.f32 %v747, %v619
        %v749 = vadd.f32 %v748, %v624
        %v750 = vadd.f32 %v749, %v629
        %v751 = vadd.f32 %v750, %v634
        %v752 = vadd.f32 %v751, %v639
        %v753 = vadd.f32 %v752, %v644
        %v754 = vadd.f32 %v753, %v649
        %v755 = vadd.f32 %v754, %v654
        %v756 = vadd.f32 %v755, %v659
        %v757 = vadd.f32 %v756, %v664
        %v758 = vadd.f32 %v757, %v669
        %v759 = vadd.f32 %v758, %v674
        %v760 = vadd.f32 %v759, %v679
        %v761 = vadd.f32 %v760, %v684
        %v762 = vadd.f32 %v761, %v689
        %v763 = vadd.f32 %v762, %v694
        %v764 = vadd.f32 %v763, %v699
        %v765 = vrot.slane %v764, 4
        %v766 = vadd.f32 %v764, %v765
        %v767 = vrot.slane %v766, 2
        %v768 = vadd.f32 %v766, %v767
        %v769 = vrot.slane %v768, 1
        %v770 = vadd.f32 %v768, %v769
        %v771 = vmul.f32 %v384, %v384
        %v772 = vmul.f32 %v389, %v389
        %v773 = vmul.f32 %v394, %v394
        %v774 = vmul.f32 %v399, %v399
        %v775 = vmul.f32 %v404, %v404
        %v776 = vmul.f32 %v409, %v409
        %v777 = vmul.f32 %v414, %v414
        %v778 = vmul.f32 %v419, %v419
        %v779 = vmul.f32 %v424, %v424
        %v780 = vmul.f32 %v429, %v429
        %v781 = vmul.f32 %v434, %v434
        %v782 = vmul.f32 %v439, %v439
        %v783 = vmul.f32 %v444, %v444
        %v784 = vmul.f32 %v449, %v449
        %v785 = vmul.f32 %v454, %v454
        %v786 = vmul.f32 %v459, %v459
        %v787 = vmul.f32 %v464, %v464
        %v788 = vmul.f32 %v469, %v469
        %v789 = vmul.f32 %v474, %v474
        %v790 = vmul.f32 %v479, %v479
        %v791 = vmul.f32 %v484, %v484
        %v792 = vmul.f32 %v489, %v489
        %v793 = vmul.f32 %v494, %v494
        %v794 = vmul.f32 %v499, %v499
        %v795 = vmul.f32 %v504, %v504
        %v796 = vmul.f32 %v509, %v509
        %v797 = vmul.f32 %v514, %v514
        %v798 = vmul.f32 %v519, %v519
        %v799 = vmul.f32 %v524, %v524
        %v800 = vmul.f32 %v529, %v529
        %v801 = vmul.f32 %v534, %v534
        %v802 = vmul.f32 %v539, %v539
        %v803 = vmul.f32 %v544, %v544
        %v804 = vmul.f32 %v549, %v549
        %v805 = vmul.f32 %v554, %v554
        %v806 = vmul.f32 %v559, %v559
        %v807 = vmul.f32 %v564, %v564
        %v808 = vmul.f32 %v569, %v569
        %v809 = vmul.f32 %v574, %v574
        %v810 = vmul.f32 %v579, %v579
        %v811 = vmul.f32 %v584, %v584
        %v812 = vmul.f32 %v589, %v589
        %v813 = vmul.f32 %v594, %v594
        %v814 = vmul.f32 %v599, %v599
        %v815 = vmul.f32 %v604, %v604
        %v816 = vmul.f32 %v609, %v609
        %v817 = vmul.f32 %v614, %v614
        %v818 = vmul.f32 %v619, %v619
        %v819 = vmul.f32 %v624, %v624
        %v820 = vmul.f32 %v629, %v629
        %v821 = vmul.f32 %v634, %v634
        %v822 = vmul.f32 %v639, %v639
        %v823 = vmul.f32 %v644, %v644
        %v824 = vmul.f32 %v649, %v649
        %v825 = vmul.f32 %v654, %v654
        %v826 = vmul.f32 %v659, %v659
        %v827 = vmul.f32 %v664, %v664
        %v828 = vmul.f32 %v669, %v669
        %v829 = vmul.f32 %v674, %v674
        %v830 = vmul.f32 %v679, %v679
        %v831 = vmul.f32 %v684, %v684
        %v832 = vmul.f32 %v689, %v689
        %v833 = vmul.f32 %v694, %v694
        %v834 = vmul.f32 %v699, %v699
        %v835 = vadd.f32 %v771, %v772
        %v836 = vadd.f32 %v835, %v773
        %v837 = vadd.f32 %v836, %v774
        %v838 = vadd.f32 %v837, %v775
        %v839 = vadd.f32 %v838, %v776
        %v840 = vadd.f32 %v839, %v777
        %v841 = vadd.f32 %v840, %v778
        %v842 = vadd.f32 %v841, %v779
        %v843 = vadd.f32 %v842, %v780
        %v844 = vadd.f32 %v843, %v781
        %v845 = vadd.f32 %v844, %v782
        %v846 = vadd.f32 %v845, %v783
        %v847 = vadd.f32 %v846, %v784
        %v848 = vadd.f32 %v847, %v785
        %v849 = vadd.f32 %v848, %v786
        %v850 = vadd.f32 %v849, %v787
        %v851 = vadd.f32 %v850, %v788
        %v852 = vadd.f32 %v851, %v789
        %v853 = vadd.f32 %v852, %v790
        %v854 = vadd.f32 %v853, %v791
        %v855 = vadd.f32 %v854, %v792
        %v856 = vadd.f32 %v855, %v793
        %v857 = vadd.f32 %v856, %v794
        %v858 = vadd.f32 %v857, %v795
        %v859 = vadd.f32 %v858, %v796
        %v860 = vadd.f32 %v859, %v797
        %v861 = vadd.f32 %v860, %v798
        %v862 = vadd.f32 %v861, %v799
        %v863 = vadd.f32 %v862, %v800
        %v864 = vadd.f32 %v863, %v801
        %v865 = vadd.f32 %v864, %v802
        %v866 = vadd.f32 %v865, %v803
        %v867 = vadd.f32 %v866, %v804
        %v868 = vadd.f32 %v867, %v805
        %v869 = vadd.f32 %v868, %v806
        %v870 = vadd.f32 %v869, %v807
        %v871 = vadd.f32 %v870, %v808
        %v872 = vadd.f32 %v871, %v809
        %v873 = vadd.f32 %v872, %v810
        %v874 = vadd.f32 %v873, %v811
        %v875 = vadd.f32 %v874, %v812
        %v876 = vadd.f32 %v875, %v813
        %v877 = vadd.f32 %v876, %v814
        %v878 = vadd.f32 %v877, %v815
        %v879 = vadd.f32 %v878, %v816
        %v880 = vadd.f32 %v879, %v817
        %v881 = vadd.f32 %v880, %v818
        %v882 = vadd.f32 %v881, %v819
        %v883 = vadd.f32 %v882, %v820
        %v884 = vadd.f32 %v883, %v821
        %v885 = vadd.f32 %v884, %v822
        %v886 = vadd.f32 %v885, %v823
        %v887 = vadd.f32 %v886, %v824
        %v888 = vadd.f32 %v887, %v825
        %v889 = vadd.f32 %v888, %v826
        %v890 = vadd.f32 %v889, %v827
        %v891 = vadd.f32 %v890, %v828
        %v892 = vadd.f32 %v891, %v829
        %v893 = vadd.f32 %v892, %v830
        %v894 = vadd.f32 %v893, %v831
        %v895 = vadd.f32 %v894, %v832
        %v896 = vadd.f32 %v895, %v833
        %v897 = vadd.f32 %v896, %v834
        %v898 = vrot.slane %v897, 4
        %v899 = vadd.f32 %v897, %v898
        %v900 = vrot.slane %v899, 2
        %v901 = vadd.f32 %v899, %v900
        %v902 = vrot.slane %v901, 1
        %v903 = vadd.f32 %v901, %v902
        %v904 = vmul.f32 %v770, 0.001953125
        %v905 = vmul.f32 %v903, 0.001953125
        %v906 = vmul.f32 %v904, %v904
        %v907 = vsub.f32 %v905, %v906
        %v908 = vmax.f32 %v907, 0.0
        %v909 = vld [vmem:[%s209] sm:$0x1]
        %v910 = vld [vmem:[%s209 + $0x1] sm:$0x1]
        %v911 = vadd.f32 %v908, 1e-05
        %v912 = vrsqrt.pop %v911
        %v913 = vmul.f32 %v909, %v912
        %v914 = vmul.f32 %v904, %v913
        %v915 = vsub.f32 %v910, %v914
        %v916 = vlaneseq
        %v917 = vshrl.u32 %v916, 7
        %v918 = vsub.s32 0, %v917
        %v919 = vrot.slane %v913, %v918
        %v920 = vmul.f32 %v384, %v919
        %v921 = vmul.f32 %v389, %v919
        %v922 = vmul.f32 %v394, %v919
        %v923 = vmul.f32 %v399, %v919
        %v924 = vmul.f32 %v404, %v919
        %v925 = vmul.f32 %v409, %v919
        %v926 = vmul.f32 %v414, %v919
        %v927 = vmul.f32 %v419, %v919
        %v928 = vmul.f32 %v424, %v919
        %v929 = vmul.f32 %v429, %v919
        %v930 = vmul.f32 %v434, %v919
        %v931 = vmul.f32 %v439, %v919
        %v932 = vmul.f32 %v444, %v919
        %v933 = vmul.f32 %v449, %v919
        %v934 = vmul.f32 %v454, %v919
        %v935 = vmul.f32 %v459, %v919
        %v936 = vmul.f32 %v464, %v919
        %v937 = vmul.f32 %v469, %v919
        %v938 = vmul.f32 %v474, %v919
        %v939 = vmul.f32 %v479, %v919
        %v940 = vmul.f32 %v484, %v919
        %v941 = vmul.f32 %v489, %v919
        %v942 = vmul.f32 %v494, %v919
        %v943 = vmul.f32 %v499, %v919
        %v944 = vmul.f32 %v504, %v919
        %v945 = vmul.f32 %v509, %v919
        %v946 = vmul.f32 %v514, %v919
        %v947 = vmul.f32 %v519, %v919
        %v948 = vmul.f32 %v524, %v919
        %v949 = vmul.f32 %v529, %v919
        %v950 = vmul.f32 %v534, %v919
        %v951 = vmul.f32 %v539, %v919
        %v952 = vmul.f32 %v544, %v919
        %v953 = vmul.f32 %v549, %v919
        %v954 = vmul.f32 %v554, %v919
        %v955 = vmul.f32 %v559, %v919
        %v956 = vmul.f32 %v564, %v919
        %v957 = vmul.f32 %v569, %v919
        %v958 = vmul.f32 %v574, %v919
        %v959 = vmul.f32 %v579, %v919
        %v960 = vmul.f32 %v584, %v919
        %v961 = vmul.f32 %v589, %v919
        %v962 = vmul.f32 %v594, %v919
        %v963 = vmul.f32 %v599, %v919
        %v964 = vmul.f32 %v604, %v919
        %v965 = vmul.f32 %v609, %v919
        %v966 = vmul.f32 %v614, %v919
        %v967 = vmul.f32 %v619, %v919
        %v968 = vmul.f32 %v624, %v919
        %v969 = vmul.f32 %v629, %v919
        %v970 = vmul.f32 %v634, %v919
        %v971 = vmul.f32 %v639, %v919
        %v972 = vmul.f32 %v644, %v919
        %v973 = vmul.f32 %v649, %v919
        %v974 = vmul.f32 %v654, %v919
        %v975 = vmul.f32 %v659, %v919
        %v976 = vmul.f32 %v664, %v919
        %v977 = vmul.f32 %v669, %v919
        %v978 = vmul.f32 %v674, %v919
        %v979 = vmul.f32 %v679, %v919
        %v980 = vmul.f32 %v684, %v919
        %v981 = vmul.f32 %v689, %v919
        %v982 = vmul.f32 %v694, %v919
        %v983 = vmul.f32 %v699, %v919
        %v984 = vlaneseq
        %v985 = vshrl.u32 %v984, 7
        %v986 = vsub.s32 0, %v985
        %v987 = vrot.slane %v915, %v986
        %v988 = vadd.f32 %v920, %v987
        %v989 = vadd.f32 %v921, %v987
        %v990 = vadd.f32 %v922, %v987
        %v991 = vadd.f32 %v923, %v987
        %v992 = vadd.f32 %v924, %v987
        %v993 = vadd.f32 %v925, %v987
        %v994 = vadd.f32 %v926, %v987
        %v995 = vadd.f32 %v927, %v987
        %v996 = vadd.f32 %v928, %v987
        %v997 = vadd.f32 %v929, %v987
        %v998 = vadd.f32 %v930, %v987
        %v999 = vadd.f32 %v931, %v987
        %v1000 = vadd.f32 %v932, %v987
        %v1001 = vadd.f32 %v933, %v987
        %v1002 = vadd.f32 %v934, %v987
        %v1003 = vadd.f32 %v935, %v987
        %v1004 = vadd.f32 %v936, %v987
        %v1005 = vadd.f32 %v937, %v987
        %v1006 = vadd.f32 %v938, %v987
        %v1007 = vadd.f32 %v939, %v987
        %v1008 = vadd.f32 %v940, %v987
        %v1009 = vadd.f32 %v941, %v987
        %v1010 = vadd.f32 %v942, %v987
        %v1011 = vadd.f32 %v943, %v987
        %v1012 = vadd.f32 %v944, %v987
        %v1013 = vadd.f32 %v945, %v987
        %v1014 = vadd.f32 %v946, %v987
        %v1015 = vadd.f32 %v947, %v987
        %v1016 = vadd.f32 %v948, %v987
        %v1017 = vadd.f32 %v949, %v987
        %v1018 = vadd.f32 %v950, %v987
        %v1019 = vadd.f32 %v951, %v987
        %v1020 = vadd.f32 %v952, %v987
        %v1021 = vadd.f32 %v953, %v987
        %v1022 = vadd.f32 %v954, %v987
        %v1023 = vadd.f32 %v955, %v987
        %v1024 = vadd.f32 %v956, %v987
        %v1025 = vadd.f32 %v957, %v987
        %v1026 = vadd.f32 %v958, %v987
        %v1027 = vadd.f32 %v959, %v987
        %v1028 = vadd.f32 %v960, %v987
        %v1029 = vadd.f32 %v961, %v987
        %v1030 = vadd.f32 %v962, %v987
        %v1031 = vadd.f32 %v963, %v987
        %v1032 = vadd.f32 %v964, %v987
        %v1033 = vadd.f32 %v965, %v987
        %v1034 = vadd.f32 %v966, %v987
        %v1035 = vadd.f32 %v967, %v987
        %v1036 = vadd.f32 %v968, %v987
        %v1037 = vadd.f32 %v969, %v987
        %v1038 = vadd.f32 %v970, %v987
        %v1039 = vadd.f32 %v971, %v987
        %v1040 = vadd.f32 %v972, %v987
        %v1041 = vadd.f32 %v973, %v987
        %v1042 = vadd.f32 %v974, %v987
        %v1043 = vadd.f32 %v975, %v987
        %v1044 = vadd.f32 %v976, %v987
        %v1045 = vadd.f32 %v977, %v987
        %v1046 = vadd.f32 %v978, %v987
        %v1047 = vadd.f32 %v979, %v987
        %v1048 = vadd.f32 %v980, %v987
        %v1049 = vadd.f32 %v981, %v987
        %v1050 = vadd.f32 %v982, %v987
        %v1051 = vadd.f32 %v983, %v987
        %v1052 = vmax.f32 %v988, 0.0
        %v1053 = vmax.f32 %v989, 0.0
        %v1054 = vmax.f32 %v990, 0.0
        %v1055 = vmax.f32 %v991, 0.0
        %v1056 = vmax.f32 %v992, 0.0
        %v1057 = vmax.f32 %v993, 0.0
        %v1058 = vmax.f32 %v994, 0.0
        %v1059 = vmax.f32 %v995, 0.0
        %v1060 = vmax.f32 %v996, 0.0
        %v1061 = vmax.f32 %v997, 0.0
        %v1062 = vmax.f32 %v998, 0.0
        %v1063 = vmax.f32 %v999, 0.0
        %v1064 = vmax.f32 %v1000, 0.0
        %v1065 = vmax.f32 %v1001, 0.0
        %v1066 = vmax.f32 %v1002, 0.0
        %v1067 = vmax.f32 %v1003, 0.0
        %v1068 = vmax.f32 %v1004, 0.0
        %v1069 = vmax.f32 %v1005, 0.0
        %v1070 = vmax.f32 %v1006, 0.0
        %v1071 = vmax.f32 %v1007, 0.0
        %v1072 = vmax.f32 %v1008, 0.0
        %v1073 = vmax.f32 %v1009, 0.0
        %v1074 = vmax.f32 %v1010, 0.0
        %v1075 = vmax.f32 %v1011, 0.0
        %v1076 = vmax.f32 %v1012, 0.0
        %v1077 = vmax.f32 %v1013, 0.0
        %v1078 = vmax.f32 %v1014, 0.0
        %v1079 = vmax.f32 %v1015, 0.0
        %v1080 = vmax.f32 %v1016, 0.0
        %v1081 = vmax.f32 %v1017, 0.0
        %v1082 = vmax.f32 %v1018, 0.0
        %v1083 = vmax.f32 %v1019, 0.0
        %v1084 = vmax.f32 %v1020, 0.0
        %v1085 = vmax.f32 %v1021, 0.0
        %v1086 = vmax.f32 %v1022, 0.0
        %v1087 = vmax.f32 %v1023, 0.0
        %v1088 = vmax.f32 %v1024, 0.0
        %v1089 = vmax.f32 %v1025, 0.0
        %v1090 = vmax.f32 %v1026, 0.0
        %v1091 = vmax.f32 %v1027, 0.0
        %v1092 = vmax.f32 %v1028, 0.0
        %v1093 = vmax.f32 %v1029, 0.0
        %v1094 = vmax.f32 %v1030, 0.0
        %v1095 = vmax.f32 %v1031, 0.0
        %v1096 = vmax.f32 %v1032, 0.0
        %v1097 = vmax.f32 %v1033, 0.0
        %v1098 = vmax.f32 %v1034, 0.0
        %v1099 = vmax.f32 %v1035, 0.0
        %v1100 = vmax.f32 %v1036, 0.0
        %v1101 = vmax.f32 %v1037, 0.0
        %v1102 = vmax.f32 %v1038, 0.0
        %v1103 = vmax.f32 %v1039, 0.0
        %v1104 = vmax.f32 %v1040, 0.0
        %v1105 = vmax.f32 %v1041, 0.0
        %v1106 = vmax.f32 %v1042, 0.0
        %v1107 = vmax.f32 %v1043, 0.0
        %v1108 = vmax.f32 %v1044, 0.0
        %v1109 = vmax.f32 %v1045, 0.0
        %v1110 = vmax.f32 %v1046, 0.0
        %v1111 = vmax.f32 %v1047, 0.0
        %v1112 = vmax.f32 %v1048, 0.0
        %v1113 = vmax.f32 %v1049, 0.0
        %v1114 = vmax.f32 %v1050, 0.0
        %v1115 = vmax.f32 %v1051, 0.0
        %1116 = vst [vmem:[%s236] sm:$0xff] %v1052
        %1117 = vst [vmem:[%s236 + $0x8] sm:$0xff] %v1053
        %1118 = vst [vmem:[%s236 + $0x10] sm:$0xff] %v1054
        %1119 = vst [vmem:[%s236 + $0x18] sm:$0xff] %v1055
        %1120 = vst [vmem:[%s236 + $0x20] sm:$0xff] %v1056
        %1121 = vst [vmem:[%s236 + $0x28] sm:$0xff] %v1057
        %1122 = vst [vmem:[%s236 + $0x30] sm:$0xff] %v1058
        %1123 = vst [vmem:[%s236 + $0x38] sm:$0xff] %v1059
        %1124 = vst [vmem:[%s236 + $0x40] sm:$0xff] %v1060
        %1125 = vst [vmem:[%s236 + $0x48] sm:$0xff] %v1061
        %1126 = vst [vmem:[%s236 + $0x50] sm:$0xff] %v1062
        %1127 = vst [vmem:[%s236 + $0x58] sm:$0xff] %v1063
        %1128 = vst [vmem:[%s236 + $0x60] sm:$0xff] %v1064
        %1129 = vst [vmem:[%s236 + $0x68] sm:$0xff] %v1065
        %1130 = vst [vmem:[%s236 + $0x70] sm:$0xff] %v1066
        %1131 = vst [vmem:[%s236 + $0x78] sm:$0xff] %v1067
        %1132 = vst [vmem:[%s236 + $0x80] sm:$0xff] %v1068
        %1133 = vst [vmem:[%s236 + $0x88] sm:$0xff] %v1069
        %1134 = vst [vmem:[%s236 + $0x90] sm:$0xff] %v1070
        %1135 = vst [vmem:[%s236 + $0x98] sm:$0xff] %v1071
        %1136 = vst [vmem:[%s236 + $0xa0] sm:$0xff] %v1072
        %1137 = vst [vmem:[%s236 + $0xa8] sm:$0xff] %v1073
        %1138 = vst [vmem:[%s236 + $0xb0] sm:$0xff] %v1074
        %1139 = vst [vmem:[%s236 + $0xb8] sm:$0xff] %v1075
        %1140 = vst [vmem:[%s236 + $0xc0] sm:$0xff] %v1076
        %1141 = vst [vmem:[%s236 + $0xc8] sm:$0xff] %v1077
        %1142 = vst [vmem:[%s236 + $0xd0] sm:$0xff] %v1078
        %1143 = vst [vmem:[%s236 + $0xd8] sm:$0xff] %v1079
        %1144 = vst [vmem:[%s236 + $0xe0] sm:$0xff] %v1080
        %1145 = vst [vmem:[%s236 + $0xe8] sm:$0xff] %v1081
        %1146 = vst [vmem:[%s236 + $0xf0] sm:$0xff] %v1082
        %1147 = vst [vmem:[%s236 + $0xf8] sm:$0xff] %v1083
        %1148 = vst [vmem:[%s236 + $0x100] sm:$0xff] %v1084
        %1149 = vst [vmem:[%s236 + $0x108] sm:$0xff] %v1085
        %1150 = vst [vmem:[%s236 + $0x110] sm:$0xff] %v1086
        %1151 = vst [vmem:[%s236 + $0x118] sm:$0xff] %v1087
        %1152 = vst [vmem:[%s236 + $0x120] sm:$0xff] %v1088
        %1153 = vst [vmem:[%s236 + $0x128] sm:$0xff] %v1089
        %1154 = vst [vmem:[%s236 + $0x130] sm:$0xff] %v1090
        %1155 = vst [vmem:[%s236 + $0x138] sm:$0xff] %v1091
        %1156 = vst [vmem:[%s236 + $0x140] sm:$0xff] %v1092
        %1157 = vst [vmem:[%s236 + $0x148] sm:$0xff] %v1093
        %1158 = vst [vmem:[%s236 + $0x150] sm:$0xff] %v1094
        %1159 = vst [vmem:[%s236 + $0x158] sm:$0xff] %v1095
        %1160 = vst [vmem:[%s236 + $0x160] sm:$0xff] %v1096
        %1161 = vst [vmem:[%s236 + $0x168] sm:$0xff] %v1097
        %1162 = vst [vmem:[%s236 + $0x170] sm:$0xff] %v1098
        %1163 = vst [vmem:[%s236 + $0x178] sm:$0xff] %v1099
        %1164 = vst [vmem:[%s236 + $0x180] sm:$0xff] %v1100
        %1165 = vst [vmem:[%s236 + $0x188] sm:$0xff] %v1101
        %1166 = vst [vmem:[%s236 + $0x190] sm:$0xff] %v1102
        %1167 = vst [vmem:[%s236 + $0x198] sm:$0xff] %v1103
        %1168 = vst [vmem:[%s236 + $0x1a0] sm:$0xff] %v1104
        %1169 = vst [vmem:[%s236 + $0x1a8] sm:$0xff] %v1105
        %1170 = vst [vmem:[%s236 + $0x1b0] sm:$0xff] %v1106
        %1171 = vst [vmem:[%s236 + $0x1b8] sm:$0xff] %v1107
        %1172 = vst [vmem:[%s236 + $0x1c0] sm:$0xff] %v1108
        %1173 = vst [vmem:[%s236 + $0x1c8] sm:$0xff] %v1109
        %1174 = vst [vmem:[%s236 + $0x1d0] sm:$0xff] %v1110
        %1175 = vst [vmem:[%s236 + $0x1d8] sm:$0xff] %v1111
        %1176 = vst [vmem:[%s236 + $0x1e0] sm:$0xff] %v1112
        %1177 = vst [vmem:[%s236 + $0x1e8] sm:$0xff] %v1113
        %1178 = vst [vmem:[%s236 + $0x1f0] sm:$0xff] %v1114
        %1179 = vst [vmem:[%s236 + $0x1f8] sm:$0xff] %v1115
        %s1180 = sand.u32 %s102, 1
        %s1181 = scalar_lea.sflag [#allocation4], %s1180
        %s1182 = sand.u32 %s102, 1
        %s1183 = smul.addr %s1182, 512
        %s1184 = scalar_lea.vmem [#allocation8], %s1183
        // Predicated region
        $region45: #{tpu_custom_call.1} parent=31 // pred_check
          %p1185 = pneg %p112
        $region46: #{tpu_custom_call.1} parent=31 // pred_check_branch
          %1187 = sbr.rel (%p1185) target = $region48
        $region47: #{tpu_custom_call.1} parent=31 // pred_region
          %s1189 = ssub.s32 8192, 8192
          %1190 = vsyncadd %s1181, %s1189
          %s1191 = smul.addr %s21, 128
          %s1192 = scalar_lea.hbm %s3, %s1191
          %s1193 = sshll.u32 %s1184, 4
          %s1194 = int_to_ptr.vmem [resolvable:$true] %s1193
          %1199 = dma.vmem_to_hbm [thread:$0]  %s1194, 8192, %s1192, %s1181, 128, 256, 8
        $region48: #{tpu_custom_call.1} parent=31 // pred_fallthru
          _
      $region32: #{tpu_custom_call.1} parent=5 // pred_fallthru
        _
      %p1200 = scmp.le.s32.totalorder 2, %s16
      // Predicated region
      $region49: #{tpu_custom_call.1} parent=5 // pred_check
        %p1201 = pneg %p1200
      $region50: #{tpu_custom_call.1} parent=5 // pred_check_branch
        %1203 = sbr.rel (%p1201) target = $region52
      $region51: #{tpu_custom_call.1} parent=5 // pred_region
        %s1204 = ssub.s32 %s16, 2
        // Predicated region
        $region53: #{tpu_custom_call.1} parent=51 // pred_check
          %p1205 = pneg %p118
        $region54: #{tpu_custom_call.1} parent=51 // pred_check_branch
          %1207 = sbr.rel (%p1205) target = $region56
        $region55: #{tpu_custom_call.1} parent=51 // pred_region
          %s1208 = sand.u32 %s103, 1
          %s1209 = scalar_lea.sflag [#allocation4], %s1208
          %s1210 = sand.u32 %s103, 1
          %s1211 = smul.addr %s1210, 512
          %s1212 = scalar_lea.vmem [#allocation8], %s1211
          %1213 = dma.done %s1209, 8192
        $region56: #{tpu_custom_call.1} parent=51 // pred_fallthru
          _
      $region52: #{tpu_custom_call.1} parent=5 // pred_fallthru
        _
    $region6: #{tpu_custom_call.1} parent=1 // loop_footer
      %s20 = sadd.s32 1, %s16
    $region7: #{tpu_custom_call.1} parent=1 // loop_footer_branch
      %15 = sbr.rel target = $region3
    $region8: #{tpu_custom_call.1} parent=1 // loop_exit
      _
    %1214 = vsyncpa [#allocation3], 1
    %s1215 = scalar_lea.sflag [#allocation3], 1
    %1216 = vsyncpa %s1215, 1
    %1217 = vsyncpa [#allocation6], 1
    %s1218 = scalar_lea.sflag [#allocation6], 1
    %1219 = vsyncpa %s1218, 1
    %1220 = vsyncpa [#allocation4], 1
    %s1221 = scalar_lea.sflag [#allocation4], 1
    %1222 = vsyncpa %s1221, 1

</llo_original>
